<compile_context>
chip_gen: v7x
topology: tpu7x:2x2x1
jax: 0.10.0
libtpu: 0.0.40
codegen_flags: <defaults>
</compile_context>

<pallas_src>
import functools

import jax
import jax.numpy as jnp
from jax.experimental import pallas as pl
from jax.experimental.pallas import tpu as pltpu


# ---------------------------------------------------------------------------
# Fused Pallas kernel: one batch-block per grid step
# ---------------------------------------------------------------------------
def _mixhop_dense_kernel(x_ref, abig_ref, wcat_ref, bcat_ref, out_ref, *,
                         adj_pows, dim_per_pow):
    """x_ref block: (1, R, C) with R = V * Bblk, rows node-major (row = v*Bblk + j).
    abig_ref: (R, R) = kron(adj.T, I_Bblk).  wcat_ref: (C, total_dim) = [W_0|W_1|...].
    bcat_ref: (1, total_dim)."""
    h = x_ref[0]             # (R, C)
    a = abig_ref[...]        # (R, R)

    # One lane-dense matmul for ALL per-power linears.
    z = jnp.dot(h, wcat_ref[...], preferred_element_type=jnp.float32)   # (R, total_dim)

    col = jax.lax.broadcasted_iota(jnp.int32, z.shape, 1)

    # Static column offsets per adj_pows entry.
    offs, o = [], 0
    for d in dim_per_pow:
        offs.append(o)
        o += d

    max_pow = max(adj_pows)
    acc = jnp.zeros_like(z)
    cur = z
    for k in range(max_pow + 1):
        # Freeze columns whose required adjacency power is exactly k (VPU select).
        mask = None
        for p, off, d in zip(adj_pows, offs, dim_per_pow):
            if p == k:
                mk = (col >= off) & (col < off + d)
                mask = mk if mask is None else (mask | mk)
        if mask is not None:
            acc = jnp.where(mask, cur, acc)
        # Propagate all (n,l) slices of the block at once: one MXU matmul per power.
        if k < max_pow:
            cur = jnp.dot(a, cur, preferred_element_type=jnp.float32)

    out_ref[0] = acc + bcat_ref[...]


# ---------------------------------------------------------------------------
# Wrapper: build kron'd adjacency + concatenated weights at trace time, one pallas_call
# ---------------------------------------------------------------------------
def mixhop_dense_forward(x, adj, weights, biases, adj_pows, *, num_batch_blocks=2):
    """x: (N, L, V, C); adj: (V, V); weights[i]: (C, dim_i); biases[i]: (1, dim_i).
    Returns (N, L, V, total_dim)."""
    N, L, V, C = x.shape
    B = N * L
    G = num_batch_blocks if (B % num_batch_blocks == 0) else 1   # parallel batch blocks
    Bblk = B // G
    R = V * Bblk

    # Node-major rows inside each block: xb[g, v*Bblk + j, c] = x[g*Bblk + j, v, c]
    xb = jnp.transpose(x.reshape(G, Bblk, V, C), (0, 2, 1, 3)).reshape(G, R, C)

    # Batched propagation operator: (A_blk @ h)[w*Bblk+j] = sum_v adj[v, w] h[v*Bblk+j]
    a_big = jnp.kron(adj.T, jnp.eye(Bblk, dtype=adj.dtype))      # (R, R)

    wcat = jnp.concatenate(weights, axis=1)      # (C, total_dim)
    bcat = jnp.concatenate(biases, axis=-1)      # (1, total_dim)
    total_dim = wcat.shape[1]
    dim_per_pow = tuple(int(w.shape[1]) for w in weights)

    out = pl.pallas_call(
        functools.partial(_mixhop_dense_kernel,
                          adj_pows=tuple(int(p) for p in adj_pows),
                          dim_per_pow=dim_per_pow),
        out_shape=jax.ShapeDtypeStruct((G, R, total_dim), jnp.float32),
        grid=(G,),
        in_specs=[
            pl.BlockSpec((1, R, C), lambda g: (g, 0, 0)),        # x batch-block
            pl.BlockSpec((R, R), lambda g: (0, 0)),              # kron(adj.T, I)
            pl.BlockSpec(wcat.shape, lambda g: (0, 0)),          # [W_0 | W_1 | ...]
            pl.BlockSpec(bcat.shape, lambda g: (0, 0)),          # concatenated bias
        ],
        out_specs=pl.BlockSpec((1, R, total_dim), lambda g: (g, 0, 0)),
        compiler_params=pltpu.CompilerParams(dimension_semantics=("parallel",)),
    )(xb, a_big, wcat, bcat)

    # (G, R, total_dim) -> (N, L, V, total_dim)
    out = jnp.transpose(out.reshape(G, V, Bblk, total_dim), (0, 2, 1, 3))
    return out.reshape(N, L, V, total_dim)


# ---------------------------------------------------------------------------
# Deterministic parameter init (mirrors nn.Linear(num_features, dim); synthetic values)
# ---------------------------------------------------------------------------
def init_linear(key, fan_in, fan_out):
    k1, k2 = jax.random.split(key)
    bound = 1.0 / float(fan_in) ** 0.5
    w = jax.random.uniform(k1, (fan_in, fan_out), jnp.float32, -bound, bound)
    b = jax.random.uniform(k2, (1, fan_out), jnp.float32, -bound, bound)
    return w, b


# ---------------------------------------------------------------------------
# Pure-JAX reference (same math as the torch module, no Pallas) for a sanity check
# ---------------------------------------------------------------------------
def ref_forward(x, adj, weights, biases, adj_pows):
    outs = []
    for p, w, b in zip(adj_pows, weights, biases):
        xp = x
        for _ in range(p):
            xp = jnp.einsum("nlvc,vw->nlwc", xp, adj)
        outs.append(xp @ w + b)
    return jnp.concatenate(outs, axis=-1)


# ---------------------------------------------------------------------------
if __name__ == "__main__":
    key = jax.random.PRNGKey(0)

    # Small shapes consistent with the module's forward.
    N, L, V = 2, 3, 8            # batch, seq, nodes
    c_in = 4
    adj_pows = [0, 1, 2, 3]
    dim_per_pow = [8, 8, 8, 8]
    total_dim = sum(dim_per_pow)

    k_x, k_adj, key = jax.random.split(key, 3)
    x = jax.random.normal(k_x, (N, L, V, c_in), jnp.float32)
    adj = jax.random.uniform(k_adj, (V, V), jnp.float32)
    # row-normalize so adjacency powers stay well scaled
    adj = adj / jnp.sum(adj, axis=-1, keepdims=True)

    weights, biases = [], []
    for dim in dim_per_pow:
        key, sub = jax.random.split(key)
        w, b = init_linear(sub, c_in, dim)
        weights.append(w)
        biases.append(b)

    out = mixhop_dense_forward(x, adj, weights, biases, adj_pows)
    out = jax.block_until_ready(out)

    expected = ref_forward(x, adj, weights, biases, adj_pows)
    assert out.shape == (N, L, V, total_dim), out.shape
    assert jnp.allclose(out, expected, atol=1e-4, rtol=1e-4), "mismatch vs reference"

    print("KERNEL_OK")
</pallas_src>

<mosaic_0001>
module attributes {stable_mosaic.version = 11 : i64} {
  func.func @_mixhop_dense_kernel(%arg0: i32, %arg1: memref<1x24x4xf32, #tpu.memory_space<vmem>>, %arg2: memref<24x24xf32, #tpu.memory_space<vmem>>, %arg3: memref<4x32xf32, #tpu.memory_space<vmem>>, %arg4: memref<1x32xf32, #tpu.memory_space<vmem>>, %arg5: memref<1x24x32xf32, #tpu.memory_space<vmem>>) attributes {dimension_semantics = [#tpu.dimension_semantics<parallel>], iteration_bounds = array<i64: 2>, scalar_prefetch = 0 : i64, scratch_operands = 0 : i64, tpu.core_type = #tpu.core_type<tc>, window_params = [{transform_indices = @transform_0, window_bounds = array<i64: 1, 24, 4>}, {pipeline_mode = #tpu.pipeline_mode<synchronous>, transform_indices = @transform_1, window_bounds = array<i64: 24, 24>}, {pipeline_mode = #tpu.pipeline_mode<synchronous>, transform_indices = @transform_2, window_bounds = array<i64: 4, 32>}, {pipeline_mode = #tpu.pipeline_mode<synchronous>, transform_indices = @transform_3, window_bounds = array<i64: 1, 32>}, {transform_indices = @transform_4, window_bounds = array<i64: 1, 24, 32>}]} {
    %c0 = arith.constant 0 : index
    %c0_0 = arith.constant 0 : index
    %c0_1 = arith.constant 0 : index
    %0 = vector.load %arg1[%c0, %c0_0, %c0_1] : memref<1x24x4xf32, #tpu.memory_space<vmem>>, vector<1x24x4xf32>
    %1 = vector.shape_cast %0 : vector<1x24x4xf32> to vector<24x4xf32>
    %c0_2 = arith.constant 0 : index
    %c0_3 = arith.constant 0 : index
    %2 = vector.load %arg2[%c0_2, %c0_3] : memref<24x24xf32, #tpu.memory_space<vmem>>, vector<24x24xf32>
    %c0_4 = arith.constant 0 : index
    %c0_5 = arith.constant 0 : index
    %3 = vector.load %arg3[%c0_4, %c0_5] : memref<4x32xf32, #tpu.memory_space<vmem>>, vector<4x32xf32>
    %cst = arith.constant dense<0.000000e+00> : vector<24x32xf32>
    %4 = tpu.matmul %1, %3, %cst {dimension_numbers = #tpu.dot_dimension_numbers<[1], [0], [0], [1], [0, 0, 1, 1], [], []>} : vector<24x4xf32>, vector<4x32xf32>, vector<24x32xf32> -> vector<24x32xf32>
    %5 = tpu.iota {dimensions = array<i32: 1>} : vector<24x32xi32>
    %cst_6 = arith.constant 0.000000e+00 : f32
    %6 = vector.broadcast %cst_6 : f32 to vector<24x32xf32>
    %c0_i32 = arith.constant 0 : i32
    %7 = vector.broadcast %c0_i32 : i32 to vector<24x32xi32>
    %8 = arith.cmpi sge, %5, %7 : vector<24x32xi32>
    %c8_i32 = arith.constant 8 : i32
    %9 = vector.broadcast %c8_i32 : i32 to vector<24x32xi32>
    %10 = arith.cmpi slt, %5, %9 : vector<24x32xi32>
    %11 = arith.andi %8, %10 : vector<24x32xi1>
    %12 = arith.select %11, %4, %6 : vector<24x32xi1>, vector<24x32xf32>
    %cst_7 = arith.constant dense<0.000000e+00> : vector<24x32xf32>
    %13 = tpu.matmul %2, %4, %cst_7 {dimension_numbers = #tpu.dot_dimension_numbers<[1], [0], [0], [1], [0, 0, 1, 1], [], []>} : vector<24x24xf32>, vector<24x32xf32>, vector<24x32xf32> -> vector<24x32xf32>
    %c8_i32_8 = arith.constant 8 : i32
    %14 = vector.broadcast %c8_i32_8 : i32 to vector<24x32xi32>
    %15 = arith.cmpi sge, %5, %14 : vector<24x32xi32>
    %c16_i32 = arith.constant 16 : i32
    %16 = vector.broadcast %c16_i32 : i32 to vector<24x32xi32>
    %17 = arith.cmpi slt, %5, %16 : vector<24x32xi32>
    %18 = arith.andi %15, %17 : vector<24x32xi1>
    %19 = arith.select %18, %13, %12 : vector<24x32xi1>, vector<24x32xf32>
    %cst_9 = arith.constant dense<0.000000e+00> : vector<24x32xf32>
    %20 = tpu.matmul %2, %13, %cst_9 {dimension_numbers = #tpu.dot_dimension_numbers<[1], [0], [0], [1], [0, 0, 1, 1], [], []>} : vector<24x24xf32>, vector<24x32xf32>, vector<24x32xf32> -> vector<24x32xf32>
    %c16_i32_10 = arith.constant 16 : i32
    %21 = vector.broadcast %c16_i32_10 : i32 to vector<24x32xi32>
    %22 = arith.cmpi sge, %5, %21 : vector<24x32xi32>
    %c24_i32 = arith.constant 24 : i32
    %23 = vector.broadcast %c24_i32 : i32 to vector<24x32xi32>
    %24 = arith.cmpi slt, %5, %23 : vector<24x32xi32>
    %25 = arith.andi %22, %24 : vector<24x32xi1>
    %26 = arith.select %25, %20, %19 : vector<24x32xi1>, vector<24x32xf32>
    %cst_11 = arith.constant dense<0.000000e+00> : vector<24x32xf32>
    %27 = tpu.matmul %2, %20, %cst_11 {dimension_numbers = #tpu.dot_dimension_numbers<[1], [0], [0], [1], [0, 0, 1, 1], [], []>} : vector<24x24xf32>, vector<24x32xf32>, vector<24x32xf32> -> vector<24x32xf32>
    %c24_i32_12 = arith.constant 24 : i32
    %28 = vector.broadcast %c24_i32_12 : i32 to vector<24x32xi32>
    %29 = arith.cmpi sge, %5, %28 : vector<24x32xi32>
    %c32_i32 = arith.constant 32 : i32
    %30 = vector.broadcast %c32_i32 : i32 to vector<24x32xi32>
    %31 = arith.cmpi slt, %5, %30 : vector<24x32xi32>
    %32 = arith.andi %29, %31 : vector<24x32xi1>
    %33 = arith.select %32, %27, %26 : vector<24x32xi1>, vector<24x32xf32>
    %c0_13 = arith.constant 0 : index
    %c0_14 = arith.constant 0 : index
    %34 = vector.load %arg4[%c0_13, %c0_14] : memref<1x32xf32, #tpu.memory_space<vmem>>, vector<1x32xf32>
    %35 = vector.broadcast %34 : vector<1x32xf32> to vector<24x32xf32>
    %36 = arith.addf %33, %35 : vector<24x32xf32>
    %c0_15 = arith.constant 0 : index
    %c0_16 = arith.constant 0 : index
    %c0_17 = arith.constant 0 : index
    %37 = vector.load %arg5[%c0_15, %c0_16, %c0_17] : memref<1x24x32xf32, #tpu.memory_space<vmem>>, vector<1x24x32xf32>
    %38 = vector.shape_cast %37 : vector<1x24x32xf32> to vector<24x32xf32>
    %39 = vector.shape_cast %36 : vector<24x32xf32> to vector<1x24x32xf32>
    tpu.vector_store %arg5[%c0_15, %c0_16, %c0_17], %39 {strides = array<i32>} : memref<1x24x32xf32, #tpu.memory_space<vmem>>, vector<1x24x32xf32>,
    return
  }
  func.func @transform_0(%arg0: i32) -> (i32, i32, i32) {
    %c0_i32 = arith.constant 0 : i32
    %c0_i32_0 = arith.constant 0 : i32
    %c0_i32_1 = arith.constant 0 : i32
    return %arg0, %c0_i32, %c0_i32_0 : i32, i32, i32
  }
  func.func @transform_1(%arg0: i32) -> (i32, i32) {
    %c0_i32 = arith.constant 0 : i32
    %c0_i32_0 = arith.constant 0 : i32
    %c0_i32_1 = arith.constant 0 : i32
    return %c0_i32, %c0_i32_0 : i32, i32
  }
  func.func @transform_2(%arg0: i32) -> (i32, i32) {
    %c0_i32 = arith.constant 0 : i32
    %c0_i32_0 = arith.constant 0 : i32
    %c0_i32_1 = arith.constant 0 : i32
    return %c0_i32, %c0_i32_0 : i32, i32
  }
  func.func @transform_3(%arg0: i32) -> (i32, i32) {
    %c0_i32 = arith.constant 0 : i32
    %c0_i32_0 = arith.constant 0 : i32
    %c0_i32_1 = arith.constant 0 : i32
    return %c0_i32, %c0_i32_0 : i32, i32
  }
  func.func @transform_4(%arg0: i32) -> (i32, i32, i32) {
    %c0_i32 = arith.constant 0 : i32
    %c0_i32_0 = arith.constant 0 : i32
    %c0_i32_1 = arith.constant 0 : i32
    return %arg0, %c0_i32, %c0_i32_0 : i32, i32, i32
  }
}

</mosaic_0001>

<llo_original>
// kernel: tpu_custom_call.1
$region0: #{tpu_custom_call.1}
  #allocation0 [shape = 'u32[]', space=smem, size = 0x4, offset = 0x4, fixed_abs, tag = 'smem constant byte address 0x4 - core index']
  #allocation1 [shape = 'u32[144,128]{1,0:T(1,128)}', space=vmem, size = 0x12000, scoped, tag = 'internal scratch']
  %s0 = inlined_call_operand.vmem [shape: f32[2,24,4], index: 0, kind: input, shape index: {}]
  %s1 = inlined_call_operand.vmem [shape: f32[24,24], index: 1, kind: input, shape index: {}]
  %s2 = inlined_call_operand.vmem [shape: f32[4,32], index: 2, kind: input, shape index: {}]
  %s3 = inlined_call_operand.vmem [shape: f32[1,32], index: 3, kind: input, shape index: {}]
  %s4 = inlined_call_operand.hbm [shape: f32[2,24,32], index: 4, kind: output, shape index: {}]
  %s5 = sld [smem:[#allocation0]]
  $region49: #{tpu_custom_call.1} parent=0
    _
  %s7 = ssub.s32 1, %s5
  %s8 = scalar_select 0, %s7, %s5
  $region1: #{tpu_custom_call.1} parent=0
    #allocation2 [shape = 'u8[24576]{0}', space=vmem, size = 0x6000, scoped, tag = 'output window, operand 0']
    #allocation3 [shape = 's32[2]{0}', space=sflag, size = 0x8, scoped, tag = 'scoped memory for tpu_custom_call.1']
    %9 = vsyncpa [#allocation3], 0
    %s10 = scalar_lea.sflag [#allocation3], 1
    %11 = vsyncpa %s10, 0
    loop: start=0, step=1, limit=4
    $region2: #{tpu_custom_call.1} parent=1 // loop_pre_header
      _
    $region3: #{tpu_custom_call.1} parent=1 // loop_header
      %s13 = sphi 0, %s17
      %p14 = scmp.ge.s32.totalorder %s13, 4
      %s23 = sphi 0, %s25
      %s26 = sphi 0, %s23
      %s27 = sphi 0, %s26
      %s43 = sphi 0, %s27
      %s47 = sphi 0, %s47
      %s49 = sphi 0, %s47
      %s50 = sphi 0, %s49
      %s64 = sphi 0, %s50
      %s68 = sphi 0, %s68
      %s70 = sphi 0, %s68
      %s71 = sphi 0, %s70
      %s85 = sphi 0, %s71
      %s89 = sphi 0, %s89
      %s91 = sphi 0, %s89
      %s92 = sphi 0, %s91
      %s106 = sphi 0, %s92
      %s112 = sphi 0, %s114
      %s115 = sphi 0, %s112
      %s116 = sphi 0, %s115
      %s132 = sphi 0, %s116
    $region4: #{tpu_custom_call.1} parent=1 // loop_header_branch
      %16 = sbr.rel (%p14) target = $region8
    $region5: #{tpu_custom_call.1} parent=1 // loop_body
      %s18 = ssub.s32 %s13, 1
      %s19 = ssub.s32 %s13, 2
      %s20 = sadd.s32 %s13, 1
      %s21 = ssub.s32 %s13, %s20
      %p22 = scmp.eq.s32.totalorder %s21, 0
      %s24 = sadd.s32 %s23, 1
      %s25 = scalar_select %p22, %s23, %s24
      %p28 = pneg %p22
      %p29 = scmp.eq.s32.totalorder %s13, 1
      %p30 = por %p28, %p29
      %p31 = scmp.ne.s32.totalorder %s23, %s26
      %p32 = scmp.eq.s32.totalorder %s13, 0
      %p33 = por %p31, %p32
      %p34 = scmp.ne.s32.totalorder %s23, %s26
      %p35 = scmp.eq.s32.totalorder %s18, 1
      %p36 = por %p34, %p35
      %p37 = scmp.ne.s32.totalorder %s26, %s27
      %p38 = scmp.eq.s32.totalorder %s18, 0
      %p39 = por %p37, %p38
      %p40 = scmp.ne.s32.totalorder %s26, %s27
      %p41 = scmp.eq.s32.totalorder %s19, 1
      %p42 = por %p40, %p41
      %p44 = scmp.ne.s32.totalorder %s27, %s43
      %p45 = scmp.eq.s32.totalorder %s19, 0
      %p46 = por %p44, %p45
      %s48 = sadd.s32 %s47, 1
      %p51 = scmp.eq.s32.totalorder %s13, 1
      %p52 = scmp.ne.s32.totalorder %s47, %s49
      %p53 = scmp.eq.s32.totalorder %s13, 0
      %p54 = por %p52, %p53
      %p55 = scmp.ne.s32.totalorder %s47, %s49
      %p56 = scmp.eq.s32.totalorder %s18, 1
      %p57 = por %p55, %p56
      %p58 = scmp.ne.s32.totalorder %s49, %s50
      %p59 = scmp.eq.s32.totalorder %s18, 0
      %p60 = por %p58, %p59
      %p61 = scmp.ne.s32.totalorder %s49, %s50
      %p62 = scmp.eq.s32.totalorder %s19, 1
      %p63 = por %p61, %p62
      %p65 = scmp.ne.s32.totalorder %s50, %s64
      %p66 = scmp.eq.s32.totalorder %s19, 0
      %p67 = por %p65, %p66
      %s69 = sadd.s32 %s68, 1
      %p72 = scmp.eq.s32.totalorder %s13, 1
      %p73 = scmp.ne.s32.totalorder %s68, %s70
      %p74 = scmp.eq.s32.totalorder %s13, 0
      %p75 = por %p73, %p74
      %p76 = scmp.ne.s32.totalorder %s68, %s70
      %p77 = scmp.eq.s32.totalorder %s18, 1
      %p78 = por %p76, %p77
      %p79 = scmp.ne.s32.totalorder %s70, %s71
      %p80 = scmp.eq.s32.totalorder %s18, 0
      %p81 = por %p79, %p80
      %p82 = scmp.ne.s32.totalorder %s70, %s71
      %p83 = scmp.eq.s32.totalorder %s19, 1
      %p84 = por %p82, %p83
      %p86 = scmp.ne.s32.totalorder %s71, %s85
      %p87 = scmp.eq.s32.totalorder %s19, 0
      %p88 = por %p86, %p87
      %s90 = sadd.s32 %s89, 1
      %p93 = scmp.eq.s32.totalorder %s13, 1
      %p94 = scmp.ne.s32.totalorder %s89, %s91
      %p95 = scmp.eq.s32.totalorder %s13, 0
      %p96 = por %p94, %p95
      %p97 = scmp.ne.s32.totalorder %s89, %s91
      %p98 = scmp.eq.s32.totalorder %s18, 1
      %p99 = por %p97, %p98
      %p100 = scmp.ne.s32.totalorder %s91, %s92
      %p101 = scmp.eq.s32.totalorder %s18, 0
      %p102 = por %p100, %p101
      %p103 = scmp.ne.s32.totalorder %s91, %s92
      %p104 = scmp.eq.s32.totalorder %s19, 1
      %p105 = por %p103, %p104
      %p107 = scmp.ne.s32.totalorder %s92, %s106
      %p108 = scmp.eq.s32.totalorder %s19, 0
      %p109 = por %p107, %p108
      %s110 = ssub.s32 %s13, %s20
      %p111 = scmp.eq.s32.totalorder %s110, 0
      %s113 = sadd.s32 %s112, 1
      %s114 = scalar_select %p111, %s112, %s113
      %p117 = pneg %p111
      %p118 = scmp.eq.s32.totalorder %s13, 1
      %p119 = por %p117, %p118
      %p120 = scmp.ne.s32.totalorder %s112, %s115
      %p121 = scmp.eq.s32.totalorder %s13, 0
      %p122 = por %p120, %p121
      %p123 = scmp.ne.s32.totalorder %s112, %s115
      %p124 = scmp.eq.s32.totalorder %s18, 1
      %p125 = por %p123, %p124
      %p126 = scmp.ne.s32.totalorder %s115, %s116
      %p127 = scmp.eq.s32.totalorder %s18, 0
      %p128 = por %p126, %p127
      %p129 = scmp.ne.s32.totalorder %s115, %s116
      %p130 = scmp.eq.s32.totalorder %s19, 1
      %p131 = por %p129, %p130
      %p133 = scmp.ne.s32.totalorder %s116, %s132
      %p134 = scmp.eq.s32.totalorder %s19, 0
      %p135 = por %p133, %p134
      %p136 = scmp.le.s32.totalorder 1, %s13
      %p137 = scmp.lt.s32.totalorder %s13, 3
      %p138 = pnand %p136, %p137
      %p139 = pneg %p138
      // Predicated region
      $region9: #{tpu_custom_call.1} parent=5 // pred_check
        _
      $region10: #{tpu_custom_call.1} parent=5 // pred_check_branch
        %141 = sbr.rel (%p138) target = $region12
      $region11: #{tpu_custom_call.1} parent=5 // pred_region
        %s142 = ssub.s32 %s13, 1
        // Predicated region
        $region13: #{tpu_custom_call.1} parent=11 // pred_check
          %p143 = pneg %p60
        $region14: #{tpu_custom_call.1} parent=11 // pred_check_branch
          %145 = sbr.rel (%p143) target = $region16
        $region15: #{tpu_custom_call.1} parent=11 // pred_region
          _
        $region16: #{tpu_custom_call.1} parent=11 // pred_fallthru
          _
        // Predicated region
        $region17: #{tpu_custom_call.1} parent=11 // pred_check
          %p146 = pneg %p81
        $region18: #{tpu_custom_call.1} parent=11 // pred_check_branch
          %148 = sbr.rel (%p146) target = $region20
        $region19: #{tpu_custom_call.1} parent=11 // pred_region
          _
        $region20: #{tpu_custom_call.1} parent=11 // pred_fallthru
          _
        // Predicated region
        $region21: #{tpu_custom_call.1} parent=11 // pred_check
          %p149 = pneg %p102
        $region22: #{tpu_custom_call.1} parent=11 // pred_check_branch
          %151 = sbr.rel (%p149) target = $region24
        $region23: #{tpu_custom_call.1} parent=11 // pred_region
          _
        $region24: #{tpu_custom_call.1} parent=11 // pred_fallthru
          _
      $region12: #{tpu_custom_call.1} parent=5 // pred_fallthru
        _
      %p152 = scmp.lt.s32.totalorder %s13, 2
      // Predicated region
      $region25: #{tpu_custom_call.1} parent=5 // pred_check
        %p153 = pneg %p152
      $region26: #{tpu_custom_call.1} parent=5 // pred_check_branch
        %155 = sbr.rel (%p153) target = $region28
      $region27: #{tpu_custom_call.1} parent=5 // pred_region
        // Predicated region
        $region29: #{tpu_custom_call.1} parent=27 // pred_check
          %p156 = pneg %p33
        $region30: #{tpu_custom_call.1} parent=27 // pred_check_branch
          %158 = sbr.rel (%p156) target = $region32
        $region31: #{tpu_custom_call.1} parent=27 // pred_region
          %p159 = scmp.lt.s32.totalorder %s13, 1
          %s160 = scalar_select %p159, %s13, 1
          %s161 = smul.addr %s160, 3
          %s162 = smul.addr %s161, 8
          %s163 = scalar_lea.vmem %s0, %s162
        $region32: #{tpu_custom_call.1} parent=27 // pred_fallthru
          _
      $region28: #{tpu_custom_call.1} parent=5 // pred_fallthru
        _
      %p164 = scmp.le.s32.totalorder 1, %s13
      %p165 = scmp.lt.s32.totalorder %s13, 3
      %p166 = pnand %p164, %p165
      %p167 = pneg %p166
      // Predicated region
      $region33: #{tpu_custom_call.1} parent=5 // pred_check
        _
      $region34: #{tpu_custom_call.1} parent=5 // pred_check_branch
        %169 = sbr.rel (%p166) target = $region36
      $region35: #{tpu_custom_call.1} parent=5 // pred_region
        %s170 = ssub.s32 %s13, 1
        %p171 = scmp.lt.s32.totalorder %s18, 1
        %s172 = scalar_select %p171, %s18, 1
        %s173 = smul.addr %s172, 3
        %s174 = smul.addr %s173, 8
        %s175 = scalar_lea.vmem %s0, %s174
        %p176 = pneg %p39
        %p177 = pneg %p36
        %p178 = pneg %p60
        %p179 = pneg %p57
        %p180 = pneg %p81
        %p181 = pneg %p78
        %p182 = pneg %p102
        %p183 = pneg %p99
        %p184 = pneg %p128
        %p185 = pneg %p125
        %s186 = sand.u32 %s115, 1
        %s187 = scalar_lea.sflag [#allocation3], %s186
        %s188 = sand.u32 %s115, 1
        %s189 = smul.addr %s188, 24
        %s190 = scalar_lea.vmem [#allocation2], %s189
        %p191 = scmp.lt.s32.totalorder %s18, 1
        %s192 = scalar_select %p191, %s18, 1
        %s193 = smul.addr %s192, 3
        %s194 = smul.addr %s193, 8
        %s195 = scalar_lea.vmem %s0, %s194
        %v196 = vld [vmem:[%s195] sm:$0xff]
        %v197 = vld [vmem:[%s195 + $0x8] sm:$0xff]
        %v198 = vld [vmem:[%s195 + $0x10] sm:$0xff]
        %v199 = vld [vmem:[%s1] sm:$0xff]
        %v200 = vld [vmem:[%s1 + $0x8] sm:$0xff]
        %v201 = vld [vmem:[%s1 + $0x10] sm:$0xff]
        %v202 = vld [vmem:[%s2] sm:$0xf]
        %vm203 = vcmask 31744
        %v205 = vsel %vm203, %v196, 0
        %v208 = vsel %vm203, %v197, 0
        %v211 = vsel %vm203, %v198, 0
        %vm213 = vcmask 1043456
        %v215 = vsel %vm213, %v202, 0
        %217 = vmatprep.subr.mxu0 0.0
        %218 = vmatpush1.msra.mxu0 %v215
        %219 = vmatprep.subr.mxu0 0.0
        %220 = vmatpush1.msra.mxu0 0.0
        %221 = vmatprep.subr.mxu0 0.0
        %222 = vmatpush1.msra.mxu0 0.0
        %223 = vmatprep.subr.mxu0 0.0
        %224 = vmatpush1.msra.mxu0 0.0
        %225 = vmatprep.subr.mxu0 0.0
        %226 = vmatpush1.msra.mxu0 0.0
        %227 = vmatprep.subr.mxu0 0.0
        %228 = vmatpush1.msra.mxu0 0.0
        %229 = vmatprep.subr.mxu0 0.0
        %230 = vmatpush1.msra.mxu0 0.0
        %231 = vmatprep.subr.mxu0 0.0
        %232 = vmatpush1.msra.mxu0 0.0
        %233 = vmatprep.subr.mxu0 0.0
        %234 = vmatpush1.msra.mxu0 0.0
        %235 = vmatprep.subr.mxu0 0.0
        %236 = vmatpush1.msra.mxu0 0.0
        %237 = vmatprep.subr.mxu0 0.0
        %238 = vmatpush1.msra.mxu0 0.0
        %239 = vmatprep.subr.mxu0 0.0
        %240 = vmatpush1.msra.mxu0 0.0
        %241 = vmatprep.subr.mxu0 0.0
        %242 = vmatpush1.msra.mxu0 0.0
        %243 = vmatprep.subr.mxu0 0.0
        %244 = vmatpush1.msra.mxu0 0.0
        %245 = vmatprep.subr.mxu0 0.0
        %246 = vmatpush1.msra.mxu0 0.0
        %247 = vmatprep.subr.mxu0 0.0
        %248 = vmatpush1.msra.mxu0 0.0
        %249 = vmatprep.subr.mxu0 0.0
        %250 = vmatpush1.msra.mxu0 0.0
        %251 = vmatprep.subr.mxu0 0.0
        %252 = vmatpush1.msra.mxu0 0.0
        %253 = vmatprep.subr.mxu0 0.0
        %254 = vmatpush1.msra.mxu0 0.0
        %255 = vmatprep.subr.mxu0 0.0
        %256 = vmatpush1.msra.mxu0 0.0
        %257 = vmatprep.subr.mxu0 0.0
        %258 = vmatpush1.msra.mxu0 0.0
        %259 = vmatprep.subr.mxu0 0.0
        %260 = vmatpush1.msra.mxu0 0.0
        %261 = vmatprep.subr.mxu0 0.0
        %262 = vmatpush1.msra.mxu0 0.0
        %263 = vmatprep.subr.mxu0 0.0
        %264 = vmatpush1.msra.mxu0 0.0
        %265 = vmatprep.subr.mxu0 0.0
        %266 = vmatpush1.msra.mxu0 0.0
        %267 = vmatprep.subr.mxu0 0.0
        %268 = vmatpush1.msra.mxu0 0.0
        %269 = vmatprep.subr.mxu0 0.0
        %270 = vmatpush1.msra.mxu0 0.0
        %271 = vmatprep.subr.mxu0 0.0
        %272 = vmatpush1.msra.mxu0 0.0
        %273 = vmatprep.subr.mxu0 0.0
        %274 = vmatpush1.msra.mxu0 0.0
        %275 = vmatprep.subr.mxu0 0.0
        %276 = vmatpush1.msra.mxu0 0.0
        %277 = vmatprep.subr.mxu0 0.0
        %278 = vmatpush1.msra.mxu0 0.0
        %279 = vmatprep.subr.mxu0 0.0
        %280 = vmatpush1.msra.mxu0 0.0
        %281 = vmatprep.mubr.f32.mxu0 0.0
        %282 = vmatmul.mubr.f32.gmra.mrb[0].mxu0 %v205
        %v283 = vpop.f32.mrb[0].mxu0
        %v284 = vadd.f32 0.0, %v283
        %v285 = vpop.f32.mrb[0].mxu0
        %286 = vmatprep.mubr.f32.mxu0 0.0
        %287 = vmatmul.mubr.f32.gmra.mrb[0].mxu0 %v208
        %v288 = vpop.f32.mrb[0].mxu0
        %v289 = vadd.f32 0.0, %v288
        %v290 = vpop.f32.mrb[0].mxu0
        %291 = vmatprep.mubr.f32.mxu0 0.0
        %292 = vmatmul.mubr.f32.gmra.mrb[0].mxu0 %v211
        %v293 = vpop.f32.mrb[0].mxu0
        %v294 = vadd.f32 0.0, %v293
        %v295 = vpop.f32.mrb[0].mxu0
        %296 = vdwg.mxu0
        %v297 = vlaneseq
        %v298 = vand.u32 %v297, 127
        %vm299 = vcmp.ge.s32.totalorder %v298, 0
        %vm300 = vcmp.lt.s32.totalorder %v298, 8
        %vm301 = vmand %vm299, %vm300
        %v302 = vsel %vm301, %v284, 0.0
        %v303 = vsel %vm301, %v289, 0.0
        %v304 = vsel %vm301, %v294, 0.0
        %vm305 = vcmask 195584
        %v307 = vsel %vm305, %v199, 0
        %v310 = vsel %vm305, %v200, 0
        %v313 = vsel %vm305, %v201, 0
        %315 = vmatprep.subr.mxu0 0.0
        %316 = vmatpush1.msra.mxu0 %v284
        %317 = vmatprep.subr.mxu0 0.0
        %318 = vmatpush1.msra.mxu0 %v289
        %319 = vmatprep.subr.mxu0 0.0
        %320 = vmatpush1.msra.mxu0 %v294
        %321 = vmatprep.subr.mxu0 0.0
        %322 = vmatpush1.msra.mxu0 0.0
        %323 = vmatprep.subr.mxu0 0.0
        %324 = vmatpush1.msra.mxu0 0.0
        %325 = vmatprep.subr.mxu0 0.0
        %326 = vmatpush1.msra.mxu0 0.0
        %327 = vmatprep.subr.mxu0 0.0
        %328 = vmatpush1.msra.mxu0 0.0
        %329 = vmatprep.subr.mxu0 0.0
        %330 = vmatpush1.msra.mxu0 0.0
        %331 = vmatprep.subr.mxu0 0.0
        %332 = vmatpush1.msra.mxu0 0.0
        %333 = vmatprep.subr.mxu0 0.0
        %334 = vmatpush1.msra.mxu0 0.0
        %335 = vmatprep.subr.mxu0 0.0
        %336 = vmatpush1.msra.mxu0 0.0
        %337 = vmatprep.subr.mxu0 0.0
        %338 = vmatpush1.msra.mxu0 0.0
        %339 = vmatprep.subr.mxu0 0.0
        %340 = vmatpush1.msra.mxu0 0.0
        %341 = vmatprep.subr.mxu0 0.0
        %342 = vmatpush1.msra.mxu0 0.0
        %343 = vmatprep.subr.mxu0 0.0
        %344 = vmatpush1.msra.mxu0 0.0
        %345 = vmatprep.subr.mxu0 0.0
        %346 = vmatpush1.msra.mxu0 0.0
        %347 = vmatprep.subr.mxu0 0.0
        %348 = vmatpush1.msra.mxu0 0.0
        %349 = vmatprep.subr.mxu0 0.0
        %350 = vmatpush1.msra.mxu0 0.0
        %351 = vmatprep.subr.mxu0 0.0
        %352 = vmatpush1.msra.mxu0 0.0
        %353 = vmatprep.subr.mxu0 0.0
        %354 = vmatpush1.msra.mxu0 0.0
        %355 = vmatprep.subr.mxu0 0.0
        %356 = vmatpush1.msra.mxu0 0.0
        %357 = vmatprep.subr.mxu0 0.0
        %358 = vmatpush1.msra.mxu0 0.0
        %359 = vmatprep.subr.mxu0 0.0
        %360 = vmatpush1.msra.mxu0 0.0
        %361 = vmatprep.subr.mxu0 0.0
        %362 = vmatpush1.msra.mxu0 0.0
        %363 = vmatprep.subr.mxu0 0.0
        %364 = vmatpush1.msra.mxu0 0.0
        %365 = vmatprep.subr.mxu0 0.0
        %366 = vmatpush1.msra.mxu0 0.0
        %367 = vmatprep.subr.mxu0 0.0
        %368 = vmatpush1.msra.mxu0 0.0
        %369 = vmatprep.subr.mxu0 0.0
        %370 = vmatpush1.msra.mxu0 0.0
        %371 = vmatprep.subr.mxu0 0.0
        %372 = vmatpush1.msra.mxu0 0.0
        %373 = vmatprep.subr.mxu0 0.0
        %374 = vmatpush1.msra.mxu0 0.0
        %375 = vmatprep.subr.mxu0 0.0
        %376 = vmatpush1.msra.mxu0 0.0
        %377 = vmatprep.subr.mxu0 0.0
        %378 = vmatpush1.msra.mxu0 0.0
        %379 = vmatprep.mubr.f32.mxu0 0.0
        %380 = vmatmul.mubr.f32.gmra.mrb[0].mxu0 %v307
        %v381 = vpop.f32.mrb[0].mxu0
        %v382 = vadd.f32 0.0, %v381
        %v383 = vpop.f32.mrb[0].mxu0
        %384 = vmatprep.mubr.f32.mxu0 0.0
        %385 = vmatmul.mubr.f32.gmra.mrb[0].mxu0 %v310
        %v386 = vpop.f32.mrb[0].mxu0
        %v387 = vadd.f32 0.0, %v386
        %v388 = vpop.f32.mrb[0].mxu0
        %389 = vmatprep.mubr.f32.mxu0 0.0
        %390 = vmatmul.mubr.f32.gmra.mrb[0].mxu0 %v313
        %v391 = vpop.f32.mrb[0].mxu0
        %v392 = vadd.f32 0.0, %v391
        %v393 = vpop.f32.mrb[0].mxu0
        %394 = vdwg.mxu0
        %vm395 = vcmp.ge.s32.totalorder %v298, 8
        %vm396 = vcmp.lt.s32.totalorder %v298, 16
        %vm397 = vmand %vm395, %vm396
        %v398 = vsel %vm397, %v382, %v302
        %v399 = vsel %vm397, %v387, %v303
        %v400 = vsel %vm397, %v392, %v304
        %401 = vmatprep.subr.mxu0 0.0
        %402 = vmatpush1.msra.mxu0 %v382
        %403 = vmatprep.subr.mxu0 0.0
        %404 = vmatpush1.msra.mxu0 %v387
        %405 = vmatprep.subr.mxu0 0.0
        %406 = vmatpush1.msra.mxu0 %v392
        %407 = vmatprep.subr.mxu0 0.0
        %408 = vmatpush1.msra.mxu0 0.0
        %409 = vmatprep.subr.mxu0 0.0
        %410 = vmatpush1.msra.mxu0 0.0
        %411 = vmatprep.subr.mxu0 0.0
        %412 = vmatpush1.msra.mxu0 0.0
        %413 = vmatprep.subr.mxu0 0.0
        %414 = vmatpush1.msra.mxu0 0.0
        %415 = vmatprep.subr.mxu0 0.0
        %416 = vmatpush1.msra.mxu0 0.0
        %417 = vmatprep.subr.mxu0 0.0
        %418 = vmatpush1.msra.mxu0 0.0
        %419 = vmatprep.subr.mxu0 0.0
        %420 = vmatpush1.msra.mxu0 0.0
        %421 = vmatprep.subr.mxu0 0.0
        %422 = vmatpush1.msra.mxu0 0.0
        %423 = vmatprep.subr.mxu0 0.0
        %424 = vmatpush1.msra.mxu0 0.0
        %425 = vmatprep.subr.mxu0 0.0
        %426 = vmatpush1.msra.mxu0 0.0
        %427 = vmatprep.subr.mxu0 0.0
        %428 = vmatpush1.msra.mxu0 0.0
        %429 = vmatprep.subr.mxu0 0.0
        %430 = vmatpush1.msra.mxu0 0.0
        %431 = vmatprep.subr.mxu0 0.0
        %432 = vmatpush1.msra.mxu0 0.0
        %433 = vmatprep.subr.mxu0 0.0
        %434 = vmatpush1.msra.mxu0 0.0
        %435 = vmatprep.subr.mxu0 0.0
        %436 = vmatpush1.msra.mxu0 0.0
        %437 = vmatprep.subr.mxu0 0.0
        %438 = vmatpush1.msra.mxu0 0.0
        %439 = vmatprep.subr.mxu0 0.0
        %440 = vmatpush1.msra.mxu0 0.0
        %441 = vmatprep.subr.mxu0 0.0
        %442 = vmatpush1.msra.mxu0 0.0
        %443 = vmatprep.subr.mxu0 0.0
        %444 = vmatpush1.msra.mxu0 0.0
        %445 = vmatprep.subr.mxu0 0.0
        %446 = vmatpush1.msra.mxu0 0.0
        %447 = vmatprep.subr.mxu0 0.0
        %448 = vmatpush1.msra.mxu0 0.0
        %449 = vmatprep.subr.mxu0 0.0
        %450 = vmatpush1.msra.mxu0 0.0
        %451 = vmatprep.subr.mxu0 0.0
        %452 = vmatpush1.msra.mxu0 0.0
        %453 = vmatprep.subr.mxu0 0.0
        %454 = vmatpush1.msra.mxu0 0.0
        %455 = vmatprep.subr.mxu0 0.0
        %456 = vmatpush1.msra.mxu0 0.0
        %457 = vmatprep.subr.mxu0 0.0
        %458 = vmatpush1.msra.mxu0 0.0
        %459 = vmatprep.subr.mxu0 0.0
        %460 = vmatpush1.msra.mxu0 0.0
        %461 = vmatprep.subr.mxu0 0.0
        %462 = vmatpush1.msra.mxu0 0.0
        %463 = vmatprep.subr.mxu0 0.0
        %464 = vmatpush1.msra.mxu0 0.0
        %465 = vmatprep.mubr.f32.mxu0 0.0
        %466 = vmatmul.mubr.f32.gmra.mrb[0].mxu0 %v307
        %v467 = vpop.f32.mrb[0].mxu0
        %v468 = vadd.f32 0.0, %v467
        %v469 = vpop.f32.mrb[0].mxu0
        %470 = vmatprep.mubr.f32.mxu0 0.0
        %471 = vmatmul.mubr.f32.gmra.mrb[0].mxu0 %v310
        %v472 = vpop.f32.mrb[0].mxu0
        %v473 = vadd.f32 0.0, %v472
        %v474 = vpop.f32.mrb[0].mxu0
        %475 = vmatprep.mubr.f32.mxu0 0.0
        %476 = vmatmul.mubr.f32.gmra.mrb[0].mxu0 %v313
        %v477 = vpop.f32.mrb[0].mxu0
        %v478 = vadd.f32 0.0, %v477
        %v479 = vpop.f32.mrb[0].mxu0
        %480 = vdwg.mxu0
        %vm481 = vcmp.ge.s32.totalorder %v298, 16
        %vm482 = vcmp.lt.s32.totalorder %v298, 24
        %vm483 = vmand %vm481, %vm482
        %v484 = vsel %vm483, %v468, %v398
        %v485 = vsel %vm483, %v473, %v399
        %v486 = vsel %vm483, %v478, %v400
        %487 = vmatprep.subr.mxu0 0.0
        %488 = vmatpush1.msra.mxu0 %v468
        %489 = vmatprep.subr.mxu0 0.0
        %490 = vmatpush1.msra.mxu0 %v473
        %491 = vmatprep.subr.mxu0 0.0
        %492 = vmatpush1.msra.mxu0 %v478
        %493 = vmatprep.subr.mxu0 0.0
        %494 = vmatpush1.msra.mxu0 0.0
        %495 = vmatprep.subr.mxu0 0.0
        %496 = vmatpush1.msra.mxu0 0.0
        %497 = vmatprep.subr.mxu0 0.0
        %498 = vmatpush1.msra.mxu0 0.0
        %499 = vmatprep.subr.mxu0 0.0
        %500 = vmatpush1.msra.mxu0 0.0
        %501 = vmatprep.subr.mxu0 0.0
        %502 = vmatpush1.msra.mxu0 0.0
        %503 = vmatprep.subr.mxu0 0.0
        %504 = vmatpush1.msra.mxu0 0.0
        %505 = vmatprep.subr.mxu0 0.0
        %506 = vmatpush1.msra.mxu0 0.0
        %507 = vmatprep.subr.mxu0 0.0
        %508 = vmatpush1.msra.mxu0 0.0
        %509 = vmatprep.subr.mxu0 0.0
        %510 = vmatpush1.msra.mxu0 0.0
        %511 = vmatprep.subr.mxu0 0.0
        %512 = vmatpush1.msra.mxu0 0.0
        %513 = vmatprep.subr.mxu0 0.0
        %514 = vmatpush1.msra.mxu0 0.0
        %515 = vmatprep.subr.mxu0 0.0
        %516 = vmatpush1.msra.mxu0 0.0
        %517 = vmatprep.subr.mxu0 0.0
        %518 = vmatpush1.msra.mxu0 0.0
        %519 = vmatprep.subr.mxu0 0.0
        %520 = vmatpush1.msra.mxu0 0.0
        %521 = vmatprep.subr.mxu0 0.0
        %522 = vmatpush1.msra.mxu0 0.0
        %523 = vmatprep.subr.mxu0 0.0
        %524 = vmatpush1.msra.mxu0 0.0
        %525 = vmatprep.subr.mxu0 0.0
        %526 = vmatpush1.msra.mxu0 0.0
        %527 = vmatprep.subr.mxu0 0.0
        %528 = vmatpush1.msra.mxu0 0.0
        %529 = vmatprep.subr.mxu0 0.0
        %530 = vmatpush1.msra.mxu0 0.0
        %531 = vmatprep.subr.mxu0 0.0
        %532 = vmatpush1.msra.mxu0 0.0
        %533 = vmatprep.subr.mxu0 0.0
        %534 = vmatpush1.msra.mxu0 0.0
        %535 = vmatprep.subr.mxu0 0.0
        %536 = vmatpush1.msra.mxu0 0.0
        %537 = vmatprep.subr.mxu0 0.0
        %538 = vmatpush1.msra.mxu0 0.0
        %539 = vmatprep.subr.mxu0 0.0
        %540 = vmatpush1.msra.mxu0 0.0
        %541 = vmatprep.subr.mxu0 0.0
        %542 = vmatpush1.msra.mxu0 0.0
        %543 = vmatprep.subr.mxu0 0.0
        %544 = vmatpush1.msra.mxu0 0.0
        %545 = vmatprep.subr.mxu0 0.0
        %546 = vmatpush1.msra.mxu0 0.0
        %547 = vmatprep.subr.mxu0 0.0
        %548 = vmatpush1.msra.mxu0 0.0
        %549 = vmatprep.subr.mxu0 0.0
        %550 = vmatpush1.msra.mxu0 0.0
        %551 = vmatprep.mubr.f32.mxu0 0.0
        %552 = vmatmul.mubr.f32.gmra.mrb[0].mxu0 %v307
        %v553 = vpop.f32.mrb[0].mxu0
        %v554 = vadd.f32 0.0, %v553
        %v555 = vpop.f32.mrb[0].mxu0
        %556 = vmatprep.mubr.f32.mxu0 0.0
        %557 = vmatmul.mubr.f32.gmra.mrb[0].mxu0 %v310
        %v558 = vpop.f32.mrb[0].mxu0
        %v559 = vadd.f32 0.0, %v558
        %v560 = vpop.f32.mrb[0].mxu0
        %561 = vmatprep.mubr.f32.mxu0 0.0
        %562 = vmatmul.mubr.f32.gmra.mrb[0].mxu0 %v313
        %v563 = vpop.f32.mrb[0].mxu0
        %v564 = vadd.f32 0.0, %v563
        %v565 = vpop.f32.mrb[0].mxu0
        %566 = vdwg.mxu0
        %vm567 = vcmp.ge.s32.totalorder %v298, 24
        %vm568 = vcmp.lt.s32.totalorder %v298, 32
        %vm569 = vmand %vm567, %vm568
        %v570 = vsel %vm569, %v554, %v484
        %v571 = vsel %vm569, %v559, %v485
        %v572 = vsel %vm569, %v564, %v486
        %v573 = vld [vmem:[%s3] sm:$0x1]
        %v575 = vlaneseq
        %v576 = vshrl.u32 %v575, 7
        %v577 = vsub.s32 0, %v576
        %v578 = vrot.slane %v573, %v577
        %v580 = vadd.f32 %v570, %v578
        %v581 = vadd.f32 %v571, %v578
        %v582 = vadd.f32 %v572, %v578
        %vm583 = vcmask 261120
        %584 = vst.msk [vmem:[%s190] sm:$0xff] %vm583, %v580
        %585 = vst.msk [vmem:[%s190 + $0x8] sm:$0xff] %vm583, %v581
        %586 = vst.msk [vmem:[%s190 + $0x10] sm:$0xff] %vm583, %v582
        %s587 = sand.u32 %s115, 1
        %s588 = scalar_lea.sflag [#allocation3], %s587
        %s589 = sand.u32 %s115, 1
        %s590 = smul.addr %s589, 24
        %s591 = scalar_lea.vmem [#allocation2], %s590
        // Predicated region
        $region37: #{tpu_custom_call.1} parent=35 // pred_check
          %p592 = pneg %p125
        $region38: #{tpu_custom_call.1} parent=35 // pred_check_branch
          %594 = sbr.rel (%p592) target = $region40
        $region39: #{tpu_custom_call.1} parent=35 // pred_region
          %s596 = ssub.s32 384, 384
          %597 = vsyncadd %s588, %s596
          %s598 = smul.addr %s18, 3
          %s599 = smul.addr %s598, 128
          %s600 = scalar_lea.hbm %s4, %s599
          %s601 = sshll.u32 %s591, 4
          %s602 = int_to_ptr.vmem [resolvable:$true] %s601
          %607 = dma.vmem_to_hbm [thread:$0]  %s602, 384, %s600, %s588, 128, 128, 8
        $region40: #{tpu_custom_call.1} parent=35 // pred_fallthru
          _
      $region36: #{tpu_custom_call.1} parent=5 // pred_fallthru
        _
      %p608 = scmp.le.s32.totalorder 2, %s13
      // Predicated region
      $region41: #{tpu_custom_call.1} parent=5 // pred_check
        %p609 = pneg %p608
      $region42: #{tpu_custom_call.1} parent=5 // pred_check_branch
        %611 = sbr.rel (%p609) target = $region44
      $region43: #{tpu_custom_call.1} parent=5 // pred_region
        %s612 = ssub.s32 %s13, 2
        // Predicated region
        $region45: #{tpu_custom_call.1} parent=43 // pred_check
          %p613 = pneg %p131
        $region46: #{tpu_custom_call.1} parent=43 // pred_check_branch
          %615 = sbr.rel (%p613) target = $region48
        $region47: #{tpu_custom_call.1} parent=43 // pred_region
          %s616 = sand.u32 %s116, 1
          %s617 = scalar_lea.sflag [#allocation3], %s616
          %s618 = sand.u32 %s116, 1
          %s619 = smul.addr %s618, 24
          %s620 = scalar_lea.vmem [#allocation2], %s619
          %621 = dma.done %s617, 384
        $region48: #{tpu_custom_call.1} parent=43 // pred_fallthru
          _
      $region44: #{tpu_custom_call.1} parent=5 // pred_fallthru
        _
    $region6: #{tpu_custom_call.1} parent=1 // loop_footer
      %s17 = sadd.s32 1, %s13
    $region7: #{tpu_custom_call.1} parent=1 // loop_footer_branch
      %12 = sbr.rel target = $region3
    $region8: #{tpu_custom_call.1} parent=1 // loop_exit
      _
    %622 = vsyncpa [#allocation3], 1
    %s623 = scalar_lea.sflag [#allocation3], 1
    %624 = vsyncpa %s623, 1

</llo_original>
